<compile_context>
chip_gen: v7x
topology: tpu7x:2x2x1
jax: 0.10.0
libtpu: 0.0.40
codegen_flags: <defaults>
</compile_context>

<pallas_src>
import functools

import jax
import jax.numpy as jnp
from jax.experimental import pallas as pl
from jax.experimental.pallas import tpu as pltpu

_LANE = 128
_SUBLANE = 8


def _round_up(x, m):
    return ((x + m - 1) // m) * m


def _pad_to(a, shape):
    pads = [(0, t - s) for s, t in zip(a.shape, shape)]
    if all(p == (0, 0) for p in pads):
        return a
    return jnp.pad(a, pads)


def _value_net_kernel(x_ref, w1_ref, b1_ref, w2_ref, b2_ref, w3t_ref, b3_ref,
                      out_ref, *, precision):
    # Whole hot path (2 MXU matmuls + biases + ReLUs + final projection) runs inside the kernel.
    cd = w1_ref.dtype                                    # compute dtype for MXU operands
    x = x_ref[...].astype(cd)                            # (block_b, in_dim) — cast in-kernel, no wrapper pass

    h1 = jnp.dot(x, w1_ref[...], preferred_element_type=jnp.float32,
                 precision=precision) + b1_ref[...]
    h1 = jnp.maximum(h1, 0.0)                            # f32 epilogue (v5e has no bf16 VPU)

    h2 = jnp.dot(h1.astype(cd), w2_ref[...], preferred_element_type=jnp.float32,
                 precision=precision) + b2_ref[...]
    h2 = jnp.maximum(h2, 0.0)                            # (block_b, hid_p) f32

    if out_ref.shape[-1] == 1:
        # output_size == 1 (the module default): VPU multiply by the broadcast w3 row + XLU
        # lane-sum reduction — avoids an MXU pass that would compute 127 discarded columns.
        out = jnp.sum(h2 * w3t_ref[...], axis=-1, keepdims=True) + b3_ref[...]
    else:
        # General output_size: contract h2's lanes against w3t's lanes (w3t is (out_dim, hid_p)).
        out = jax.lax.dot_general(
            h2.astype(cd), w3t_ref[...].astype(cd),
            (((1,), (1,)), ((), ())),
            preferred_element_type=jnp.float32, precision=precision) + b3_ref[...]

    out_ref[...] = out.astype(out_ref.dtype)             # narrow (block_b, out_dim) store — only 4 B/row
    # TODO(synk): if a bundle dump ever shows the narrow store as the bottleneck, switch to a
    # lane-dense transposed (num_blocks, block_b) output and reshape outside (metadata only).


@functools.partial(jax.jit, static_argnames=("block_b", "compute_dtype", "precision"))
def custom_value_network(x, params, *, block_b=None, compute_dtype=jnp.bfloat16,
                         precision=None):
    """Pallas forward pass for CustomValueNetwork.

    x: (B, input_size) array (passed to the kernel untouched; cast happens in-kernel).
    params: dict with w1 (in,h), b1 (1,h), w2 (h,h), b2 (1,h), w3 (h,out), b3 (1,out).
    Returns (B, output_size) float32.
    """
    w1, b1 = params["w1"], params["b1"]
    w2, b2 = params["w2"], params["b2"]
    w3, b3 = params["w3"], params["b3"]

    B, in_dim = x.shape
    hidden = w1.shape[1]
    out_dim = w3.shape[1]

    cd = jnp.dtype(compute_dtype)
    cd_bytes = cd.itemsize

    # Pad the (tiny) hidden dim of the weights to the 128-lane width (exact: padded columns/rows
    # are zero and ReLU(0)=0).  x / out / the contraction dims are NOT padded.
    hid_p = _round_up(hidden, _LANE)

    # --- batch tile selection -------------------------------------------------------------
    # VMEM budget (bytes) we aim to stay under: 24 MiB leaves headroom below v7x's 32 MiB scoped
    # limit (v5e/v6e have 128 MiB physical, so this is conservative there).
    budget = 24 * 1024 * 1024
    weight_bytes = 2 * ((in_dim * hid_p + hid_p * hid_p) * cd_bytes
                        + (out_dim * hid_p + 2 * hid_p + out_dim) * 4)
    per_row_bytes = (2 * in_dim * x.dtype.itemsize    # double-buffered x block
                     + 2 * hid_p * 4                  # h1 / h2 f32 temporaries
                     + 2 * hid_p * cd_bytes           # casted matmul operands
                     + 2 * out_dim * 4)               # double-buffered output block
    cap = max(_SUBLANE,
              min(2048, max(0, (budget - weight_bytes)) // per_row_bytes // _SUBLANE * _SUBLANE))
    # TODO(synk): for hid_p >~ 2048 (w2 alone ~8 MiB bf16) add a hidden-dim grid axis (and/or
    # pipeline_mode=pl.Buffered(1) on the grid-invariant weight specs) instead of shrinking cap.

    if block_b is None:
        nsteps = max(1, pl.cdiv(B, cap))       # fewest steps that fit the VMEM budget
        if B > _SUBLANE and nsteps == 1:
            nsteps = 2                          # >= 2 steps: pipelining + both v7x TensorCores
        elif nsteps > 1 and nsteps % 2 == 1:
            nsteps += 1                         # even split across v7x's two TensorCores
        block_b = max(_SUBLANE, _round_up(pl.cdiv(B, nsteps), _SUBLANE))
    else:
        block_b = max(_SUBLANE, _round_up(int(block_b), _SUBLANE))
    grid = (pl.cdiv(B, block_b),)               # ragged last block handled by Pallas (masked writes)

    # --- parameter prep (tiny arrays; one-time per call, negligible HBM traffic) -----------
    w1p = _pad_to(w1.astype(jnp.float32), (in_dim, hid_p)).astype(cd)
    b1p = _pad_to(b1.astype(jnp.float32), (1, hid_p))
    w2p = _pad_to(w2.astype(jnp.float32), (hid_p, hid_p)).astype(cd)
    b2p = _pad_to(b2.astype(jnp.float32), (1, hid_p))
    w3tp = _pad_to(w3.astype(jnp.float32).T, (out_dim, hid_p))   # (out_dim, hid_p), kept f32
    b3p = b3.astype(jnp.float32)                                 # (1, out_dim)

    # x / out are tiled along the batch dim; params are grid-invariant full blocks (fetched once).
    rep = lambda shape: pl.BlockSpec(shape, lambda i: (0, 0))

    out = pl.pallas_call(
        functools.partial(_value_net_kernel, precision=precision),
        out_shape=jax.ShapeDtypeStruct((B, out_dim), jnp.float32),
        grid=grid,
        in_specs=[
            pl.BlockSpec((block_b, in_dim), lambda i: (i, 0)),   # x (unpadded, uncast)
            rep((in_dim, hid_p)),                                # w1
            rep((1, hid_p)),                                     # b1
            rep((hid_p, hid_p)),                                 # w2
            rep((1, hid_p)),                                     # b2
            rep((out_dim, hid_p)),                               # w3^T (row-vector layout)
            rep((1, out_dim)),                                   # b3
        ],
        out_specs=pl.BlockSpec((block_b, out_dim), lambda i: (i, 0)),
        compiler_params=pltpu.CompilerParams(
            dimension_semantics=("parallel",),
            vmem_limit_bytes=32 * 1024 * 1024,   # safe on v5e/v6e (128 MiB) and v7x (64 MiB phys)
        ),
    )(x, w1p, b1p, w2p, b2p, w3tp, b3p)

    return out


def init_params(key, input_size, hidden_size, output_size=1):
    """Deterministic init mirroring nn.Linear default: U(-1/sqrt(fan_in), 1/sqrt(fan_in))."""
    ks = jax.random.split(key, 6)

    def linear(kw, kb, fan_in, fan_out):
        bound = 1.0 / jnp.sqrt(jnp.float32(fan_in))
        w = jax.random.uniform(kw, (fan_in, fan_out), jnp.float32, -bound, bound)
        b = jax.random.uniform(kb, (1, fan_out), jnp.float32, -bound, bound)
        return w, b

    w1, b1 = linear(ks[0], ks[1], input_size, hidden_size)
    w2, b2 = linear(ks[2], ks[3], hidden_size, hidden_size)
    w3, b3 = linear(ks[4], ks[5], hidden_size, output_size)
    return dict(w1=w1, b1=b1, w2=w2, b2=b2, w3=w3, b3=b3)


def _reference(x, p):
    h1 = jnp.maximum(x.astype(jnp.float32) @ p["w1"] + p["b1"], 0.0)
    h2 = jnp.maximum(h1 @ p["w2"] + p["b2"], 0.0)
    return h2 @ p["w3"] + p["b3"]


if __name__ == "__main__":
    key = jax.random.PRNGKey(0)
    k_x, k_p = jax.random.split(key)

    input_size, hidden_size, output_size = 16, 32, 1
    batch = 8

    x = jax.random.normal(k_x, (batch, input_size), dtype=jnp.float32)
    params = init_params(k_p, input_size, hidden_size, output_size)

    ref = _reference(x, params)

    # Exact path: f32 matmul operands must match the f32 reference tightly (verifies the
    # zero-padding / unpadded-x / ragged-tiling path changes nothing numerically).
    out_f32 = jax.block_until_ready(
        custom_value_network(x, params, compute_dtype=jnp.float32))
    assert out_f32.shape == (batch, output_size)
    assert jnp.allclose(out_f32, ref, atol=1e-5, rtol=1e-5), "f32 path mismatch vs reference"

    # Default fast path: bf16 matmul operands with f32 accumulation (input-rounding-level error).
    out_bf16 = jax.block_until_ready(custom_value_network(x, params))
    assert out_bf16.shape == (batch, output_size)
    assert jnp.allclose(out_bf16, ref, atol=3e-2, rtol=3e-2), "bf16 path mismatch vs reference"

    print("KERNEL_OK")
</pallas_src>

<mosaic_0001>
module attributes {stable_mosaic.version = 11 : i64} {
  func.func @_value_net_kernel(%arg0: i32, %arg1: memref<8x16xf32, #tpu.memory_space<vmem>>, %arg2: memref<16x128xf32, #tpu.memory_space<vmem>>, %arg3: memref<1x128xf32, #tpu.memory_space<vmem>>, %arg4: memref<128x128xf32, #tpu.memory_space<vmem>>, %arg5: memref<1x128xf32, #tpu.memory_space<vmem>>, %arg6: memref<1x128xf32, #tpu.memory_space<vmem>>, %arg7: memref<1x1xf32, #tpu.memory_space<vmem>>, %arg8: memref<8x1xf32, #tpu.memory_space<vmem>>) attributes {dimension_semantics = [#tpu.dimension_semantics<parallel>], iteration_bounds = array<i64: 1>, scalar_prefetch = 0 : i64, scratch_operands = 0 : i64, tpu.core_type = #tpu.core_type<tc>, window_params = [{transform_indices = @transform_0, window_bounds = array<i64: 8, 16>}, {pipeline_mode = #tpu.pipeline_mode<synchronous>, transform_indices = @transform_1, window_bounds = array<i64: 16, 128>}, {pipeline_mode = #tpu.pipeline_mode<synchronous>, transform_indices = @transform_2, window_bounds = array<i64: 1, 128>}, {pipeline_mode = #tpu.pipeline_mode<synchronous>, transform_indices = @transform_3, window_bounds = array<i64: 128, 128>}, {pipeline_mode = #tpu.pipeline_mode<synchronous>, transform_indices = @transform_4, window_bounds = array<i64: 1, 128>}, {pipeline_mode = #tpu.pipeline_mode<synchronous>, transform_indices = @transform_5, window_bounds = array<i64: 1, 128>}, {pipeline_mode = #tpu.pipeline_mode<synchronous>, transform_indices = @transform_6, window_bounds = array<i64: 1, 1>}, {transform_indices = @transform_7, window_bounds = array<i64: 8, 1>}]} {
    %c0 = arith.constant 0 : index
    %c0_0 = arith.constant 0 : index
    %0 = vector.load %arg1[%c0, %c0_0] : memref<8x16xf32, #tpu.memory_space<vmem>>, vector<8x16xf32>
    %c0_1 = arith.constant 0 : index
    %c0_2 = arith.constant 0 : index
    %1 = vector.load %arg2[%c0_1, %c0_2] : memref<16x128xf32, #tpu.memory_space<vmem>>, vector<16x128xf32>
    %cst = arith.constant dense<0.000000e+00> : vector<8x128xf32>
    %2 = tpu.matmul %0, %1, %cst {dimension_numbers = #tpu.dot_dimension_numbers<[1], [0], [0], [1], [0, 0, 1, 1], [], []>} : vector<8x16xf32>, vector<16x128xf32>, vector<8x128xf32> -> vector<8x128xf32>
    %c0_3 = arith.constant 0 : index
    %c0_4 = arith.constant 0 : index
    %3 = vector.load %arg3[%c0_3, %c0_4] : memref<1x128xf32, #tpu.memory_space<vmem>>, vector<1x128xf32>
    %4 = vector.broadcast %3 : vector<1x128xf32> to vector<8x128xf32>
    %5 = arith.addf %2, %4 : vector<8x128xf32>
    %cst_5 = arith.constant 0.000000e+00 : f32
    %6 = vector.broadcast %cst_5 : f32 to vector<8x128xf32>
    %7 = arith.maximumf %5, %6 : vector<8x128xf32>
    %c0_6 = arith.constant 0 : index
    %c0_7 = arith.constant 0 : index
    %8 = vector.load %arg4[%c0_6, %c0_7] : memref<128x128xf32, #tpu.memory_space<vmem>>, vector<128x128xf32>
    %cst_8 = arith.constant dense<0.000000e+00> : vector<8x128xf32>
    %9 = tpu.matmul %7, %8, %cst_8 {dimension_numbers = #tpu.dot_dimension_numbers<[1], [0], [0], [1], [0, 0, 1, 1], [], []>} : vector<8x128xf32>, vector<128x128xf32>, vector<8x128xf32> -> vector<8x128xf32>
    %c0_9 = arith.constant 0 : index
    %c0_10 = arith.constant 0 : index
    %10 = vector.load %arg5[%c0_9, %c0_10] : memref<1x128xf32, #tpu.memory_space<vmem>>, vector<1x128xf32>
    %11 = vector.broadcast %10 : vector<1x128xf32> to vector<8x128xf32>
    %12 = arith.addf %9, %11 : vector<8x128xf32>
    %cst_11 = arith.constant 0.000000e+00 : f32
    %13 = vector.broadcast %cst_11 : f32 to vector<8x128xf32>
    %14 = arith.maximumf %12, %13 : vector<8x128xf32>
    %c0_12 = arith.constant 0 : index
    %c0_13 = arith.constant 0 : index
    %15 = vector.load %arg6[%c0_12, %c0_13] : memref<1x128xf32, #tpu.memory_space<vmem>>, vector<1x128xf32>
    %16 = vector.broadcast %15 : vector<1x128xf32> to vector<8x128xf32>
    %17 = arith.mulf %14, %16 : vector<8x128xf32>
    %cst_14 = arith.constant dense<0.000000e+00> : vector<8xf32>
    %18 = vector.multi_reduction <add>, %17, %cst_14 [1] : vector<8x128xf32> to vector<8xf32>
    %19 = vector.shape_cast %18 : vector<8xf32> to vector<8x1xf32>
    %c0_15 = arith.constant 0 : index
    %c0_16 = arith.constant 0 : index
    %20 = vector.load %arg7[%c0_15, %c0_16] : memref<1x1xf32, #tpu.memory_space<vmem>>, vector<1x1xf32>
    %21 = vector.broadcast %20 : vector<1x1xf32> to vector<8x1xf32>
    %22 = arith.addf %19, %21 : vector<8x1xf32>
    %c0_17 = arith.constant 0 : index
    %c0_18 = arith.constant 0 : index
    %23 = vector.load %arg8[%c0_17, %c0_18] : memref<8x1xf32, #tpu.memory_space<vmem>>, vector<8x1xf32>
    tpu.vector_store %arg8[%c0_17, %c0_18], %22 {strides = array<i32>} : memref<8x1xf32, #tpu.memory_space<vmem>>, vector<8x1xf32>,
    return
  }
  func.func @transform_0(%arg0: i32) -> (i32, i32) {
    %c0_i32 = arith.constant 0 : i32
    %c0_i32_0 = arith.constant 0 : i32
    return %arg0, %c0_i32 : i32, i32
  }
  func.func @transform_1(%arg0: i32) -> (i32, i32) {
    %c0_i32 = arith.constant 0 : i32
    %c0_i32_0 = arith.constant 0 : i32
    %c0_i32_1 = arith.constant 0 : i32
    return %c0_i32, %c0_i32_0 : i32, i32
  }
  func.func @transform_2(%arg0: i32) -> (i32, i32) {
    %c0_i32 = arith.constant 0 : i32
    %c0_i32_0 = arith.constant 0 : i32
    %c0_i32_1 = arith.constant 0 : i32
    return %c0_i32, %c0_i32_0 : i32, i32
  }
  func.func @transform_3(%arg0: i32) -> (i32, i32) {
    %c0_i32 = arith.constant 0 : i32
    %c0_i32_0 = arith.constant 0 : i32
    %c0_i32_1 = arith.constant 0 : i32
    return %c0_i32, %c0_i32_0 : i32, i32
  }
  func.func @transform_4(%arg0: i32) -> (i32, i32) {
    %c0_i32 = arith.constant 0 : i32
    %c0_i32_0 = arith.constant 0 : i32
    %c0_i32_1 = arith.constant 0 : i32
    return %c0_i32, %c0_i32_0 : i32, i32
  }
  func.func @transform_5(%arg0: i32) -> (i32, i32) {
    %c0_i32 = arith.constant 0 : i32
    %c0_i32_0 = arith.constant 0 : i32
    %c0_i32_1 = arith.constant 0 : i32
    return %c0_i32, %c0_i32_0 : i32, i32
  }
  func.func @transform_6(%arg0: i32) -> (i32, i32) {
    %c0_i32 = arith.constant 0 : i32
    %c0_i32_0 = arith.constant 0 : i32
    %c0_i32_1 = arith.constant 0 : i32
    return %c0_i32, %c0_i32_0 : i32, i32
  }
  func.func @transform_7(%arg0: i32) -> (i32, i32) {
    %c0_i32 = arith.constant 0 : i32
    %c0_i32_0 = arith.constant 0 : i32
    return %arg0, %c0_i32 : i32, i32
  }
}

</mosaic_0001>

<llo_original>
// kernel: custom_value_network.1
$region0: #{custom_value_network.1}
  #allocation0 [shape = 'u32[]', space=smem, size = 0x4, offset = 0x4, fixed_abs, tag = 'smem constant byte address 0x4 - core index']
  #allocation1 [shape = 'u32[144,128]{1,0:T(1,128)}', space=vmem, size = 0x12000, scoped, tag = 'internal scratch']
  #allocation2 [shape = 'f32[1,1]{1,0:T(1,128)S(1)}', space=vmem, size = 0x200, scoped, tag = 'scoped memory for custom_value_network.1']
  %s0 = inlined_call_operand.vmem [shape: f32[8,16], index: 0, kind: input, shape index: {}]
  %s1 = inlined_call_operand.vmem [shape: f32[16,128], index: 1, kind: input, shape index: {}]
  %s2 = inlined_call_operand.vmem [shape: f32[1,128], index: 2, kind: input, shape index: {}]
  %s3 = inlined_call_operand.vmem [shape: f32[128,128], index: 3, kind: input, shape index: {}]
  %s4 = inlined_call_operand.vmem [shape: f32[1,128], index: 4, kind: input, shape index: {}]
  %s5 = inlined_call_operand.vmem [shape: f32[1,128], index: 5, kind: input, shape index: {}]
  %s6 = inlined_call_operand.<no memory space> [shape: f32[1,1], index: 6, kind: input, shape index: {}]
  %s7 = inlined_call_operand.vmem [shape: f32[8,1], index: 7, kind: output, shape index: {}]
  %s8 = sld [smem:[#allocation0]]
  $region38: #{custom_value_network.1} parent=0
    _
  %s10 = ssub.s32 1, %s8
  %s11 = scalar_select 0, %s10, %s8
  %v12 = vstv %s6
  %13 = vst [vmem:[#allocation2] sm:$0x1] %v12
  // Predicated region
  $region2: #{custom_value_network.1} parent=0 // pred_check
    _
  $region3: #{custom_value_network.1} parent=0 // pred_check_branch
    %15 = sbr.rel (0) target = $region5
  $region4: #{custom_value_network.1} parent=0 // pred_region
    _
  $region5: #{custom_value_network.1} parent=0 // pred_fallthru
    _
  // Predicated region
  $region6: #{custom_value_network.1} parent=0 // pred_check
    _
  $region7: #{custom_value_network.1} parent=0 // pred_check_branch
    %17 = sbr.rel (0) target = $region9
  $region8: #{custom_value_network.1} parent=0 // pred_region
    _
  $region9: #{custom_value_network.1} parent=0 // pred_fallthru
    _
  // Predicated region
  $region10: #{custom_value_network.1} parent=0 // pred_check
    _
  $region11: #{custom_value_network.1} parent=0 // pred_check_branch
    %19 = sbr.rel (0) target = $region13
  $region12: #{custom_value_network.1} parent=0 // pred_region
    _
  $region13: #{custom_value_network.1} parent=0 // pred_fallthru
    _
  // Predicated region
  $region14: #{custom_value_network.1} parent=0 // pred_check
    _
  $region15: #{custom_value_network.1} parent=0 // pred_check_branch
    %21 = sbr.rel (0) target = $region17
  $region16: #{custom_value_network.1} parent=0 // pred_region
    _
  $region17: #{custom_value_network.1} parent=0 // pred_fallthru
    _
  // Predicated region
  $region18: #{custom_value_network.1} parent=0 // pred_check
    _
  $region19: #{custom_value_network.1} parent=0 // pred_check_branch
    %23 = sbr.rel (0) target = $region21
  $region20: #{custom_value_network.1} parent=0 // pred_region
    _
  $region21: #{custom_value_network.1} parent=0 // pred_fallthru
    _
  // Predicated region
  $region22: #{custom_value_network.1} parent=0 // pred_check
    _
  $region23: #{custom_value_network.1} parent=0 // pred_check_branch
    %25 = sbr.rel (0) target = $region25
  $region24: #{custom_value_network.1} parent=0 // pred_region
    _
  $region25: #{custom_value_network.1} parent=0 // pred_fallthru
    _
  // Predicated region
  $region26: #{custom_value_network.1} parent=0 // pred_check
    _
  $region27: #{custom_value_network.1} parent=0 // pred_check_branch
    %27 = sbr.rel (0) target = $region29
  $region28: #{custom_value_network.1} parent=0 // pred_region
    _
  $region29: #{custom_value_network.1} parent=0 // pred_fallthru
    _
  %v28 = vld [vmem:[%s0] sm:$0xff]
  %v29 = vld [vmem:[%s1] sm:$0xff]
  %v30 = vld [vmem:[%s1 + $0x8] sm:$0xff]
  %v31 = vld [vmem:[%s2] sm:$0x1]
  %v33 = vlaneseq
  %v34 = vshrl.u32 %v33, 7
  %v35 = vsub.s32 0, %v34
  %v36 = vrot.slane %v31, %v35
  %vm38 = vcmask 130048
  %v40 = vsel %vm38, %v28, 0
  %42 = vmatprep.subr.mxu0 0.0
  %43 = vmatpush1.msra.mxu0 %v29
  %44 = vmatprep.subr.mxu0 0.0
  %45 = vmatpush1.msra.mxu0 %v30
  %46 = vmatprep.subr.mxu0 0.0
  %47 = vmatpush1.msra.mxu0 0.0
  %48 = vmatprep.subr.mxu0 0.0
  %49 = vmatpush1.msra.mxu0 0.0
  %50 = vmatprep.subr.mxu0 0.0
  %51 = vmatpush1.msra.mxu0 0.0
  %52 = vmatprep.subr.mxu0 0.0
  %53 = vmatpush1.msra.mxu0 0.0
  %54 = vmatprep.subr.mxu0 0.0
  %55 = vmatpush1.msra.mxu0 0.0
  %56 = vmatprep.subr.mxu0 0.0
  %57 = vmatpush1.msra.mxu0 0.0
  %58 = vmatprep.subr.mxu0 0.0
  %59 = vmatpush1.msra.mxu0 0.0
  %60 = vmatprep.subr.mxu0 0.0
  %61 = vmatpush1.msra.mxu0 0.0
  %62 = vmatprep.subr.mxu0 0.0
  %63 = vmatpush1.msra.mxu0 0.0
  %64 = vmatprep.subr.mxu0 0.0
  %65 = vmatpush1.msra.mxu0 0.0
  %66 = vmatprep.subr.mxu0 0.0
  %67 = vmatpush1.msra.mxu0 0.0
  %68 = vmatprep.subr.mxu0 0.0
  %69 = vmatpush1.msra.mxu0 0.0
  %70 = vmatprep.subr.mxu0 0.0
  %71 = vmatpush1.msra.mxu0 0.0
  %72 = vmatprep.subr.mxu0 0.0
  %73 = vmatpush1.msra.mxu0 0.0
  %74 = vmatprep.subr.mxu0 0.0
  %75 = vmatpush1.msra.mxu0 0.0
  %76 = vmatprep.subr.mxu0 0.0
  %77 = vmatpush1.msra.mxu0 0.0
  %78 = vmatprep.subr.mxu0 0.0
  %79 = vmatpush1.msra.mxu0 0.0
  %80 = vmatprep.subr.mxu0 0.0
  %81 = vmatpush1.msra.mxu0 0.0
  %82 = vmatprep.subr.mxu0 0.0
  %83 = vmatpush1.msra.mxu0 0.0
  %84 = vmatprep.subr.mxu0 0.0
  %85 = vmatpush1.msra.mxu0 0.0
  %86 = vmatprep.subr.mxu0 0.0
  %87 = vmatpush1.msra.mxu0 0.0
  %88 = vmatprep.subr.mxu0 0.0
  %89 = vmatpush1.msra.mxu0 0.0
  %90 = vmatprep.subr.mxu0 0.0
  %91 = vmatpush1.msra.mxu0 0.0
  %92 = vmatprep.subr.mxu0 0.0
  %93 = vmatpush1.msra.mxu0 0.0
  %94 = vmatprep.subr.mxu0 0.0
  %95 = vmatpush1.msra.mxu0 0.0
  %96 = vmatprep.subr.mxu0 0.0
  %97 = vmatpush1.msra.mxu0 0.0
  %98 = vmatprep.subr.mxu0 0.0
  %99 = vmatpush1.msra.mxu0 0.0
  %100 = vmatprep.subr.mxu0 0.0
  %101 = vmatpush1.msra.mxu0 0.0
  %102 = vmatprep.subr.mxu0 0.0
  %103 = vmatpush1.msra.mxu0 0.0
  %104 = vmatprep.subr.mxu0 0.0
  %105 = vmatpush1.msra.mxu0 0.0
  %106 = vmatprep.mubr.f32.mxu0 0.0
  %107 = vmatmul.mubr.f32.gmra.mrb[0].mxu0 %v40
  %v108 = vpop.f32.mrb[0].mxu0
  %v109 = vadd.f32 %v36, %v108
  %v110 = vpop.f32.mrb[0].mxu0
  %111 = vdwg.mxu0
  %v112 = vmax.f32 %v109, 0.0
  %v113 = vld [vmem:[%s3] sm:$0xff]
  %v114 = vld [vmem:[%s3 + $0x8] sm:$0xff]
  %v115 = vld [vmem:[%s3 + $0x10] sm:$0xff]
  %v116 = vld [vmem:[%s3 + $0x18] sm:$0xff]
  %v117 = vld [vmem:[%s3 + $0x20] sm:$0xff]
  %v118 = vld [vmem:[%s3 + $0x28] sm:$0xff]
  %v119 = vld [vmem:[%s3 + $0x30] sm:$0xff]
  %v120 = vld [vmem:[%s3 + $0x38] sm:$0xff]
  %v121 = vld [vmem:[%s3 + $0x40] sm:$0xff]
  %v122 = vld [vmem:[%s3 + $0x48] sm:$0xff]
  %v123 = vld [vmem:[%s3 + $0x50] sm:$0xff]
  %v124 = vld [vmem:[%s3 + $0x58] sm:$0xff]
  %v125 = vld [vmem:[%s3 + $0x60] sm:$0xff]
  %v126 = vld [vmem:[%s3 + $0x68] sm:$0xff]
  %v127 = vld [vmem:[%s3 + $0x70] sm:$0xff]
  %v128 = vld [vmem:[%s3 + $0x78] sm:$0xff]
  %v129 = vld [vmem:[%s4] sm:$0x1]
  %v131 = vlaneseq
  %v132 = vshrl.u32 %v131, 7
  %v133 = vsub.s32 0, %v132
  %v134 = vrot.slane %v129, %v133
  %136 = vmatprep.subr.mxu0 0.0
  %137 = vmatpush1.msra.mxu0 %v113
  %138 = vmatprep.subr.mxu0 0.0
  %139 = vmatpush1.msra.mxu0 %v114
  %140 = vmatprep.subr.mxu0 0.0
  %141 = vmatpush1.msra.mxu0 %v115
  %142 = vmatprep.subr.mxu0 0.0
  %143 = vmatpush1.msra.mxu0 %v116
  %144 = vmatprep.subr.mxu0 0.0
  %145 = vmatpush1.msra.mxu0 %v117
  %146 = vmatprep.subr.mxu0 0.0
  %147 = vmatpush1.msra.mxu0 %v118
  %148 = vmatprep.subr.mxu0 0.0
  %149 = vmatpush1.msra.mxu0 %v119
  %150 = vmatprep.subr.mxu0 0.0
  %151 = vmatpush1.msra.mxu0 %v120
  %152 = vmatprep.subr.mxu0 0.0
  %153 = vmatpush1.msra.mxu0 %v121
  %154 = vmatprep.subr.mxu0 0.0
  %155 = vmatpush1.msra.mxu0 %v122
  %156 = vmatprep.subr.mxu0 0.0
  %157 = vmatpush1.msra.mxu0 %v123
  %158 = vmatprep.subr.mxu0 0.0
  %159 = vmatpush1.msra.mxu0 %v124
  %160 = vmatprep.subr.mxu0 0.0
  %161 = vmatpush1.msra.mxu0 %v125
  %162 = vmatprep.subr.mxu0 0.0
  %163 = vmatpush1.msra.mxu0 %v126
  %164 = vmatprep.subr.mxu0 0.0
  %165 = vmatpush1.msra.mxu0 %v127
  %166 = vmatprep.subr.mxu0 0.0
  %167 = vmatpush1.msra.mxu0 %v128
  %168 = vmatprep.subr.mxu0 0.0
  %169 = vmatpush1.msra.mxu0 0.0
  %170 = vmatprep.subr.mxu0 0.0
  %171 = vmatpush1.msra.mxu0 0.0
  %172 = vmatprep.subr.mxu0 0.0
  %173 = vmatpush1.msra.mxu0 0.0
  %174 = vmatprep.subr.mxu0 0.0
  %175 = vmatpush1.msra.mxu0 0.0
  %176 = vmatprep.subr.mxu0 0.0
  %177 = vmatpush1.msra.mxu0 0.0
  %178 = vmatprep.subr.mxu0 0.0
  %179 = vmatpush1.msra.mxu0 0.0
  %180 = vmatprep.subr.mxu0 0.0
  %181 = vmatpush1.msra.mxu0 0.0
  %182 = vmatprep.subr.mxu0 0.0
  %183 = vmatpush1.msra.mxu0 0.0
  %184 = vmatprep.subr.mxu0 0.0
  %185 = vmatpush1.msra.mxu0 0.0
  %186 = vmatprep.subr.mxu0 0.0
  %187 = vmatpush1.msra.mxu0 0.0
  %188 = vmatprep.subr.mxu0 0.0
  %189 = vmatpush1.msra.mxu0 0.0
  %190 = vmatprep.subr.mxu0 0.0
  %191 = vmatpush1.msra.mxu0 0.0
  %192 = vmatprep.subr.mxu0 0.0
  %193 = vmatpush1.msra.mxu0 0.0
  %194 = vmatprep.subr.mxu0 0.0
  %195 = vmatpush1.msra.mxu0 0.0
  %196 = vmatprep.subr.mxu0 0.0
  %197 = vmatpush1.msra.mxu0 0.0
  %198 = vmatprep.subr.mxu0 0.0
  %199 = vmatpush1.msra.mxu0 0.0
  %200 = vmatprep.mubr.f32.mxu0 0.0
  %201 = vmatmul.mubr.f32.gmra.mrb[0].mxu0 %v112
  %v202 = vpop.f32.mrb[0].mxu0
  %v203 = vadd.f32 %v134, %v202
  %v204 = vpop.f32.mrb[0].mxu0
  %205 = vdwg.mxu0
  %v206 = vmax.f32 %v203, 0.0
  %v207 = vld [vmem:[%s5] sm:$0x1]
  %v209 = vlaneseq
  %v210 = vshrl.u32 %v209, 7
  %v211 = vsub.s32 0, %v210
  %v212 = vrot.slane %v207, %v211
  %v214 = vmul.f32 %v206, %v212
  %215 = vadd.xlane.f32.xlu0 %v214
  %v216 = vpop.xlane.xlu0 %215
  %v217 = vld [vmem:[#allocation2] sm:$0x1]
  %v219 = vlaneseq
  %v220 = vshrl.u32 %v219, 7
  %v221 = vsub.s32 0, %v220
  %v222 = vrot.slane %v217, %v221
  %v224 = vadd.f32 %v216, %v222
  %vm225 = vcmask 7168
  %226 = vst.msk [vmem:[%s7] sm:$0xff] %vm225, %v224
  // Predicated region
  $region30: #{custom_value_network.1} parent=0 // pred_check
    _
  $region31: #{custom_value_network.1} parent=0 // pred_check_branch
    %228 = sbr.rel (0) target = $region33
  $region32: #{custom_value_network.1} parent=0 // pred_region
    _
  $region33: #{custom_value_network.1} parent=0 // pred_fallthru
    _
  // Predicated region
  $region34: #{custom_value_network.1} parent=0 // pred_check
    _
  $region35: #{custom_value_network.1} parent=0 // pred_check_branch
    %230 = sbr.rel (0) target = $region37
  $region36: #{custom_value_network.1} parent=0 // pred_region
    _
  $region37: #{custom_value_network.1} parent=0 // pred_fallthru
    _

</llo_original>
